<compile_context>
chip_gen: v7x
topology: tpu7x:2x2x1
jax: 0.10.0
libtpu: 0.0.40
codegen_flags: <defaults>
</compile_context>

<pallas_src>
import functools
import math

import jax
import jax.numpy as jnp
from jax.experimental import pallas as pl
from jax.experimental.pallas import tpu as pltpu


# ---------------------------------------------------------------------------
# Shared sin/cos core: one Cody-Waite range reduction feeds both polynomials.
# Accurate to ~1e-6 absolute for |arg| up to ~1e4 (timestep-embedding regime).
# ---------------------------------------------------------------------------
_TWO_OVER_PI = 0.6366197723675814
# pi/2 split into exactly-representable pieces (k * piece is exact for the k
# range this module sees), so the reduced argument keeps ~full f32 accuracy.
_PIO2_1 = 1.5703125
_PIO2_2 = 4.8351287841796875e-4
_PIO2_3 = 3.13855707645416259765625e-7
_PIO2_4 = 6.077100628276710e-11
# cephes single-precision minimax coefficients on [-pi/4, pi/4].
_S1, _S2, _S3 = -1.6666654611e-1, 8.3321608736e-3, -1.9515295891e-4
_C1, _C2, _C3 = 4.166664568298827e-2, -1.388731625493765e-3, 2.443315711809948e-5


def _range_reduce(t):
    """t -> (r, k) with t = k*(pi/2) + r, |r| <= pi/4, k an integer-valued f32."""
    k = jnp.floor(t * _TWO_OVER_PI + 0.5)
    r = t - k * _PIO2_1
    r = r - k * _PIO2_2
    r = r - k * _PIO2_3
    r = r - k * _PIO2_4
    return r, k


def _sin_poly(r, z):
    return r + r * z * (_S1 + z * (_S2 + z * _S3))


def _cos_poly(z):
    return 1.0 - 0.5 * z + z * z * (_C1 + z * (_C2 + z * _C3))


def _select_quadrant(sin_r, cos_r, q):
    """sin(r + q*pi/2) from the two base polynomials (q: int32, already masked &3)."""
    res = jnp.where((q & 1) == 1, cos_r, sin_r)
    return jnp.where((q & 2) == 2, -res, res)


# ---------------------------------------------------------------------------
# Kernel body (one batch tile, single dense store).
# ---------------------------------------------------------------------------
def _pos_emb_kernel(x_ref, tbl_ref, out_ref, *, group):
    """group == 1 (dim >= 128, or dim does not divide 128):
         x_ref   (TB, 1)          positions
         tbl_ref (1, half_dim)    frequencies
         out_ref (TB, dim)        [sin | cos] written as one slab
       group > 1 (lane-folded, dim < 128):
         x_ref   (TBr, group)             `group` positions per folded row
         tbl_ref (group+1, group*dim)     rows 0..g-1: freq masked per group;
                                          row g: quadrant offset (0=sin,1=cos lanes)
         out_ref (TBr, group*dim)         `group` embedding rows per folded row
    """
    if group == 1:
        # Half-width argument: one shared range reduction serves sin and cos.
        arg = x_ref[...] * tbl_ref[0:1, :]                  # (TB, half_dim) VPU bcast
        r, k = _range_reduce(arg)
        z = r * r
        sin_r = _sin_poly(r, z)
        cos_r = _cos_poly(z)
        ki = k.astype(jnp.int32)
        s = _select_quadrant(sin_r, cos_r, ki & 3)          # sin(arg)
        c = _select_quadrant(sin_r, cos_r, (ki + 1) & 3)    # cos(arg), same reduction
        out = jnp.concatenate([s, c], axis=-1)              # (TB, dim) single slab
    else:
        # Lane-dense argument: arg[r, l] = x[r, l // dim] * freq[(l % dim) % half_dim],
        # built as a short sum of broadcast multiplies against per-group masked freq
        # rows (exact f32, pure VPU; a handful of ops vs ~30+ for the polynomials).
        # TODO(synk): a one-hot (g, W) MXU matmul (precision=HIGHEST) could move this
        # expansion onto the idle MXU slot.
        arg = x_ref[:, 0:1] * tbl_ref[0:1, :]
        for i in range(1, group):
            arg = arg + x_ref[:, i:i + 1] * tbl_ref[i:i + 1, :]
        r, k = _range_reduce(arg)
        z = r * r
        sin_r = _sin_poly(r, z)
        cos_r = _cos_poly(z)
        # cos lanes get +1 quadrant: cos(t) == sin(t + pi/2), applied AFTER range
        # reduction, so it is exact (no pi/2-absorption error).
        q_off = tbl_ref[group:group + 1, :].astype(jnp.int32)
        q = (k.astype(jnp.int32) + q_off) & 3
        out = _select_quadrant(sin_r, cos_r, q)
    out_ref[...] = out.astype(out_ref.dtype)


# ---------------------------------------------------------------------------
# Wrapper
# ---------------------------------------------------------------------------
def _round_up(v: int, m: int) -> int:
    return -(-v // m) * m


def _vmem_budget_bytes():
    """(tile budget, vmem capacity) in bytes, generation-aware."""
    cap = 128 * 1024 * 1024                       # v5e/v6e physical VMEM fallback
    try:
        cap = int(getattr(pltpu.get_tpu_info(), "vmem_capacity_bytes", cap))
    except Exception:
        pass
    # ~24 MiB of double-buffered tiles on 128 MiB parts (v5e/v6e), ~16 MiB on
    # v7x's 64 MiB part; never below 4 MiB.
    budget = max(4 * 2**20, min(24 * 2**20, cap // 4))
    return budget, cap


def sinusoidal_pos_emb(x: jax.Array, dim: int, *,
                       out_dtype=jnp.float32,
                       block_rows: int | None = None) -> jax.Array:
    """x: (B,) positions/timesteps -> (B, dim) = [sin(x*f) | cos(x*f)]."""
    assert x.ndim == 1, "x must be rank-1 (batch of positions/timesteps)"
    assert dim % 2 == 0, "dim must be even"
    # dim == 2 divides by zero in the reference (half_dim - 1 == 0).
    assert dim >= 4, "dim must be >= 4 (reference divides by half_dim - 1)"
    half_dim = dim // 2
    b = int(x.shape[0])
    scale = math.log(10000.0) / (half_dim - 1)
    freq = jnp.exp(jnp.arange(half_dim, dtype=jnp.float32) * (-scale))     # (half_dim,)

    # Lane-fold factor: pack `group` consecutive batch rows into one 128-lane
    # output row when dim < 128 so both the compute and the store are lane dense.
    if dim < 128 and 128 % dim == 0 and b % (128 // dim) == 0:
        group = 128 // dim
    else:
        group = 1   # TODO(synk): pad B up to a multiple of 128//dim to fold here too.
    width = group * dim
    rows = b // group

    if group == 1:
        x2 = x.astype(jnp.float32).reshape(rows, 1)
        table = freq.reshape(1, half_dim)
    else:
        x2 = x.astype(jnp.float32).reshape(rows, group)
        lane = jnp.arange(width)
        freq_tiled = jnp.tile(jnp.concatenate([freq, freq]), group)        # (width,)
        # Rows 0..g-1: freq placed only in that group's dim lanes (0 elsewhere).
        expand = jnp.where(lane[None, :] // dim == jnp.arange(group)[:, None],
                           freq_tiled[None, :], 0.0).astype(jnp.float32)   # (g, width)
        # Row g: quadrant offset (+1 quarter turn == cos) for each group's 2nd half.
        q_off = ((lane % dim) >= half_dim).astype(jnp.float32)[None, :]    # (1, width)
        table = jnp.concatenate([expand, q_off], axis=0)                   # (g+1, width)

    out_itemsize = jnp.dtype(out_dtype).itemsize
    align = {4: 8, 2: 16, 1: 32}.get(out_itemsize, 8)   # sublane packing of out dtype

    budget, vmem_cap = _vmem_budget_bytes()
    if block_rows is None:
        # Double-buffered out tile + x tile (x rows pad to 128 f32 lanes in VMEM).
        per_row = 2 * (width * out_itemsize + 128 * 4)
        cap_rows = max(align, ((budget // per_row) // align) * align)
        n_steps = max(1, -(-rows // cap_rows))
        # v7x: guarantee >= 2 (even) grid steps when there is enough work so the
        # "parallel" batch axis can be sharded across both TensorCores.
        if n_steps < 2 and rows >= 2 * align:
            n_steps = 2
        if n_steps > 1 and n_steps % 2:
            n_steps += 1
        tb = -(-rows // n_steps)
        tb = rows if tb >= rows else min(_round_up(tb, align), rows)
    else:
        tb = int(block_rows)
        if tb != rows and (tb <= 0 or tb % align != 0):
            raise ValueError(
                f"block_rows must equal {rows} (all folded rows) or be a positive "
                f"multiple of {align} for out_dtype={jnp.dtype(out_dtype).name}; "
                f"got {block_rows}")
        tb = min(tb, rows)

    grid = (pl.cdiv(rows, tb),)
    kernel = functools.partial(_pos_emb_kernel, group=group)

    cost = pl.CostEstimate(
        flops=2 * b * dim,
        transcendentals=b * dim,
        bytes_accessed=4 * b + 4 * int(table.size) + b * dim * out_itemsize,
    )

    out_folded = pl.pallas_call(
        kernel,
        out_shape=jax.ShapeDtypeStruct((rows, width), out_dtype),
        grid_spec=pltpu.PrefetchScalarGridSpec(
            num_scalar_prefetch=0,
            grid=grid,
            in_specs=[
                pl.BlockSpec((tb, x2.shape[1]), lambda i: (i, 0)),   # batch tile of x
                pl.BlockSpec(table.shape, lambda i: (0, 0)),         # constant table
            ],
            out_specs=pl.BlockSpec((tb, width), lambda i: (i, 0)),
        ),
        compiler_params=pltpu.CompilerParams(
            dimension_semantics=("parallel",),
            vmem_limit_bytes=int(min(vmem_cap // 2, 64 * 2**20)),
        ),
        cost_estimate=cost,
    )(x2, table)

    # Un-fold: (rows, group*dim) -> (B, dim) is a free contiguous row-major reshape.
    return out_folded.reshape(b, dim)


def _reference(x: jax.Array, dim: int) -> jax.Array:
    half_dim = dim // 2
    emb = math.log(10000.0) / (half_dim - 1)
    emb = jnp.exp(jnp.arange(half_dim, dtype=jnp.float32) * -emb)
    emb = x.astype(jnp.float32)[:, None] * emb[None, :]
    return jnp.concatenate([jnp.sin(emb), jnp.cos(emb)], axis=-1)


if __name__ == "__main__":
    key = jax.random.PRNGKey(0)
    batch = 8
    # timestep-like positive floats
    x = jax.random.uniform(key, (batch,), dtype=jnp.float32, minval=0.0, maxval=100.0)

    # Lane-folded path (dim < 128).
    dim = 32
    out = jax.block_until_ready(sinusoidal_pos_emb(x, dim))
    ref = _reference(x, dim)
    assert out.shape == (batch, dim), out.shape
    err = float(jnp.max(jnp.abs(out - ref)))
    assert err < 1e-4, err

    # Half-width shared-range-reduction path (dim >= 128).
    dim2 = 256
    out2 = jax.block_until_ready(sinusoidal_pos_emb(x, dim2))
    ref2 = _reference(x, dim2)
    assert out2.shape == (batch, dim2), out2.shape
    err2 = float(jnp.max(jnp.abs(out2 - ref2)))
    assert err2 < 1e-4, err2

    print("KERNEL_OK")
</pallas_src>

<mosaic_0001>
module attributes {stable_mosaic.version = 11 : i64} {
  func.func @_pos_emb_kernel(%arg0: i32, %arg1: memref<2x4xf32, #tpu.memory_space<vmem>>, %arg2: memref<5x128xf32, #tpu.memory_space<vmem>>, %arg3: memref<2x128xf32, #tpu.memory_space<vmem>>) attributes {dimension_semantics = [#tpu.dimension_semantics<parallel>], iteration_bounds = array<i64: 1>, scalar_prefetch = 0 : i64, scratch_operands = 0 : i64, tpu.core_type = #tpu.core_type<tc>, window_params = [{transform_indices = @transform_0, window_bounds = array<i64: 2, 4>}, {pipeline_mode = #tpu.pipeline_mode<synchronous>, transform_indices = @transform_1, window_bounds = array<i64: 5, 128>}, {transform_indices = @transform_2, window_bounds = array<i64: 2, 128>}]} {
    %c0 = arith.constant 0 : index
    %c0_0 = arith.constant 0 : index
    %0 = vector.load %arg1[%c0, %c0_0] : memref<2x4xf32, #tpu.memory_space<vmem>>, vector<2x1xf32>
    %c0_1 = arith.constant 0 : index
    %c0_2 = arith.constant 0 : index
    %1 = vector.load %arg2[%c0_1, %c0_2] : memref<5x128xf32, #tpu.memory_space<vmem>>, vector<1x128xf32>
    %2 = vector.broadcast %0 : vector<2x1xf32> to vector<2x128xf32>
    %3 = vector.broadcast %1 : vector<1x128xf32> to vector<2x128xf32>
    %4 = arith.mulf %2, %3 : vector<2x128xf32>
    %c0_3 = arith.constant 0 : index
    %c1 = arith.constant 1 : index
    %5 = vector.load %arg1[%c0_3, %c1] : memref<2x4xf32, #tpu.memory_space<vmem>>, vector<2x1xf32>
    %c1_4 = arith.constant 1 : index
    %c0_5 = arith.constant 0 : index
    %6 = vector.load %arg2[%c1_4, %c0_5] : memref<5x128xf32, #tpu.memory_space<vmem>>, vector<1x128xf32>
    %7 = vector.broadcast %5 : vector<2x1xf32> to vector<2x128xf32>
    %8 = vector.broadcast %6 : vector<1x128xf32> to vector<2x128xf32>
    %9 = arith.mulf %7, %8 : vector<2x128xf32>
    %10 = arith.addf %4, %9 : vector<2x128xf32>
    %c0_6 = arith.constant 0 : index
    %c2 = arith.constant 2 : index
    %11 = vector.load %arg1[%c0_6, %c2] : memref<2x4xf32, #tpu.memory_space<vmem>>, vector<2x1xf32>
    %c2_7 = arith.constant 2 : index
    %c0_8 = arith.constant 0 : index
    %12 = vector.load %arg2[%c2_7, %c0_8] : memref<5x128xf32, #tpu.memory_space<vmem>>, vector<1x128xf32>
    %13 = vector.broadcast %11 : vector<2x1xf32> to vector<2x128xf32>
    %14 = vector.broadcast %12 : vector<1x128xf32> to vector<2x128xf32>
    %15 = arith.mulf %13, %14 : vector<2x128xf32>
    %16 = arith.addf %10, %15 : vector<2x128xf32>
    %c0_9 = arith.constant 0 : index
    %c3 = arith.constant 3 : index
    %17 = vector.load %arg1[%c0_9, %c3] : memref<2x4xf32, #tpu.memory_space<vmem>>, vector<2x1xf32>
    %c3_10 = arith.constant 3 : index
    %c0_11 = arith.constant 0 : index
    %18 = vector.load %arg2[%c3_10, %c0_11] : memref<5x128xf32, #tpu.memory_space<vmem>>, vector<1x128xf32>
    %19 = vector.broadcast %17 : vector<2x1xf32> to vector<2x128xf32>
    %20 = vector.broadcast %18 : vector<1x128xf32> to vector<2x128xf32>
    %21 = arith.mulf %19, %20 : vector<2x128xf32>
    %22 = arith.addf %16, %21 : vector<2x128xf32>
    %cst = arith.constant 0.636619746 : f32
    %23 = vector.broadcast %cst : f32 to vector<2x128xf32>
    %24 = arith.mulf %22, %23 : vector<2x128xf32>
    %cst_12 = arith.constant 5.000000e-01 : f32
    %25 = vector.broadcast %cst_12 : f32 to vector<2x128xf32>
    %26 = arith.addf %24, %25 : vector<2x128xf32>
    %27 = math.floor %26 : vector<2x128xf32>
    %cst_13 = arith.constant 1.5703125 : f32
    %28 = vector.broadcast %cst_13 : f32 to vector<2x128xf32>
    %29 = arith.mulf %27, %28 : vector<2x128xf32>
    %30 = arith.subf %22, %29 : vector<2x128xf32>
    %cst_14 = arith.constant 4.83512878E-4 : f32
    %31 = vector.broadcast %cst_14 : f32 to vector<2x128xf32>
    %32 = arith.mulf %27, %31 : vector<2x128xf32>
    %33 = arith.subf %30, %32 : vector<2x128xf32>
    %cst_15 = arith.constant 3.13855708E-7 : f32
    %34 = vector.broadcast %cst_15 : f32 to vector<2x128xf32>
    %35 = arith.mulf %27, %34 : vector<2x128xf32>
    %36 = arith.subf %33, %35 : vector<2x128xf32>
    %cst_16 = arith.constant 6.07710063E-11 : f32
    %37 = vector.broadcast %cst_16 : f32 to vector<2x128xf32>
    %38 = arith.mulf %27, %37 : vector<2x128xf32>
    %39 = arith.subf %36, %38 : vector<2x128xf32>
    %40 = arith.mulf %39, %39 : vector<2x128xf32>
    %41 = arith.mulf %39, %40 : vector<2x128xf32>
    %cst_17 = arith.constant -1.95152956E-4 : f32
    %42 = vector.broadcast %cst_17 : f32 to vector<2x128xf32>
    %43 = arith.mulf %40, %42 : vector<2x128xf32>
    %cst_18 = arith.constant 0.00833216123 : f32
    %44 = vector.broadcast %cst_18 : f32 to vector<2x128xf32>
    %45 = arith.addf %44, %43 : vector<2x128xf32>
    %46 = arith.mulf %40, %45 : vector<2x128xf32>
    %cst_19 = arith.constant -0.166666552 : f32
    %47 = vector.broadcast %cst_19 : f32 to vector<2x128xf32>
    %48 = arith.addf %47, %46 : vector<2x128xf32>
    %49 = arith.mulf %41, %48 : vector<2x128xf32>
    %50 = arith.addf %39, %49 : vector<2x128xf32>
    %cst_20 = arith.constant 5.000000e-01 : f32
    %51 = vector.broadcast %cst_20 : f32 to vector<2x128xf32>
    %52 = arith.mulf %51, %40 : vector<2x128xf32>
    %cst_21 = arith.constant 1.000000e+00 : f32
    %53 = vector.broadcast %cst_21 : f32 to vector<2x128xf32>
    %54 = arith.subf %53, %52 : vector<2x128xf32>
    %55 = arith.mulf %40, %40 : vector<2x128xf32>
    %cst_22 = arith.constant 2.44331568E-5 : f32
    %56 = vector.broadcast %cst_22 : f32 to vector<2x128xf32>
    %57 = arith.mulf %40, %56 : vector<2x128xf32>
    %cst_23 = arith.constant -0.00138873165 : f32
    %58 = vector.broadcast %cst_23 : f32 to vector<2x128xf32>
    %59 = arith.addf %58, %57 : vector<2x128xf32>
    %60 = arith.mulf %40, %59 : vector<2x128xf32>
    %cst_24 = arith.constant 0.0416666456 : f32
    %61 = vector.broadcast %cst_24 : f32 to vector<2x128xf32>
    %62 = arith.addf %61, %60 : vector<2x128xf32>
    %63 = arith.mulf %55, %62 : vector<2x128xf32>
    %64 = arith.addf %54, %63 : vector<2x128xf32>
    %c4 = arith.constant 4 : index
    %c0_25 = arith.constant 0 : index
    %65 = vector.load %arg2[%c4, %c0_25] : memref<5x128xf32, #tpu.memory_space<vmem>>, vector<1x128xf32>
    %66 = arith.fptosi %65 : vector<1x128xf32> to vector<1x128xi32>
    %67 = arith.fptosi %27 : vector<2x128xf32> to vector<2x128xi32>
    %68 = vector.broadcast %66 : vector<1x128xi32> to vector<2x128xi32>
    %69 = arith.addi %67, %68 : vector<2x128xi32>
    %c3_i32 = arith.constant 3 : i32
    %70 = vector.broadcast %c3_i32 : i32 to vector<2x128xi32>
    %71 = arith.andi %69, %70 : vector<2x128xi32>
    %c1_i32 = arith.constant 1 : i32
    %72 = vector.broadcast %c1_i32 : i32 to vector<2x128xi32>
    %73 = arith.andi %71, %72 : vector<2x128xi32>
    %c1_i32_26 = arith.constant 1 : i32
    %74 = vector.broadcast %c1_i32_26 : i32 to vector<2x128xi32>
    %75 = arith.cmpi eq, %73, %74 : vector<2x128xi32>
    %76 = arith.select %75, %64, %50 : vector<2x128xi1>, vector<2x128xf32>
    %c2_i32 = arith.constant 2 : i32
    %77 = vector.broadcast %c2_i32 : i32 to vector<2x128xi32>
    %78 = arith.andi %71, %77 : vector<2x128xi32>
    %c2_i32_27 = arith.constant 2 : i32
    %79 = vector.broadcast %c2_i32_27 : i32 to vector<2x128xi32>
    %80 = arith.cmpi eq, %78, %79 : vector<2x128xi32>
    %cst_28 = arith.constant 0.000000e+00 : f32
    %81 = vector.broadcast %cst_28 : f32 to vector<2x128xf32>
    %82 = arith.subf %81, %76 : vector<2x128xf32>
    %83 = arith.select %80, %82, %76 : vector<2x128xi1>, vector<2x128xf32>
    %c0_29 = arith.constant 0 : index
    %c0_30 = arith.constant 0 : index
    %84 = vector.load %arg3[%c0_29, %c0_30] : memref<2x128xf32, #tpu.memory_space<vmem>>, vector<2x128xf32>
    tpu.vector_store %arg3[%c0_29, %c0_30], %83 {strides = array<i32>} : memref<2x128xf32, #tpu.memory_space<vmem>>, vector<2x128xf32>,
    return
  }
  func.func @transform_0(%arg0: i32) -> (i32, i32) {
    %c0_i32 = arith.constant 0 : i32
    %c0_i32_0 = arith.constant 0 : i32
    return %arg0, %c0_i32 : i32, i32
  }
  func.func @transform_1(%arg0: i32) -> (i32, i32) {
    %c0_i32 = arith.constant 0 : i32
    %c0_i32_0 = arith.constant 0 : i32
    %c0_i32_1 = arith.constant 0 : i32
    return %c0_i32, %c0_i32_0 : i32, i32
  }
  func.func @transform_2(%arg0: i32) -> (i32, i32) {
    %c0_i32 = arith.constant 0 : i32
    %c0_i32_0 = arith.constant 0 : i32
    return %arg0, %c0_i32 : i32, i32
  }
}

</mosaic_0001>

<llo_original>
// kernel: tpu_custom_call.1
$region0: #{tpu_custom_call.1}
  #allocation0 [shape = 'u32[]', space=smem, size = 0x4, offset = 0x4, fixed_abs, tag = 'smem constant byte address 0x4 - core index']
  #allocation1 [shape = 'u32[144,128]{1,0:T(1,128)}', space=vmem, size = 0x12000, scoped, tag = 'internal scratch']
  %s0 = inlined_call_operand.hbm [shape: f32[2,4], index: 0, kind: input, shape index: {}]
  %s1 = inlined_call_operand.hbm [shape: f32[5,128], index: 1, kind: input, shape index: {}]
  %s2 = inlined_call_operand.hbm [shape: f32[2,128], index: 2, kind: output, shape index: {}]
  %s3 = sld [smem:[#allocation0]]
  $region26: #{tpu_custom_call.1} parent=0
    _
  %s5 = ssub.s32 1, %s3
  %s6 = scalar_select 0, %s5, %s3
  $region1: #{tpu_custom_call.1} parent=0
    #allocation2 [shape = 'u8[1024]{0}', space=vmem, size = 0x400, scoped, tag = 'input window, operand 0, single buffered']
    #allocation3 [shape = 's32[1]{0}', space=sflag, size = 0x4, scoped, tag = 'scoped memory for tpu_custom_call.1']
    #allocation4 [shape = 's32[1]{0}', space=sflag, size = 0x4, scoped, tag = 'scoped memory for tpu_custom_call.1']
    #allocation5 [shape = 'u8[4096]{0}', space=vmem, size = 0x1000, scoped, tag = 'input window, operand 1, single buffered']
    #allocation6 [shape = 's32[1]{0}', space=sflag, size = 0x4, scoped, tag = 'scoped memory for tpu_custom_call.1']
    #allocation7 [shape = 'u8[1024]{0}', space=vmem, size = 0x400, scoped, tag = 'output window, operand 0, single buffered']
    %7 = vsyncpa [#allocation3], 0
    %8 = vsyncpa [#allocation6], 0
    %9 = vsyncpa [#allocation4], 0
    // Predicated region
    $region2: #{tpu_custom_call.1} parent=1 // pred_check
      _
    $region3: #{tpu_custom_call.1} parent=1 // pred_check_branch
      %11 = sbr.rel (0) target = $region5
    $region4: #{tpu_custom_call.1} parent=1 // pred_region
      %s13 = ssub.s32 32, 32
      %14 = vsyncadd [#allocation3], %s13
      %s16 = sshll.u32 [#allocation2], 4
      %s17 = int_to_ptr.vmem [resolvable:$true] %s16
      %19 = dma.hbm_to_vmem [thread:$0]  %s0, 32, %s17, [#allocation3]
    $region5: #{tpu_custom_call.1} parent=1 // pred_fallthru
      _
    // Predicated region
    $region6: #{tpu_custom_call.1} parent=1 // pred_check
      _
    $region7: #{tpu_custom_call.1} parent=1 // pred_check_branch
      %21 = sbr.rel (0) target = $region9
    $region8: #{tpu_custom_call.1} parent=1 // pred_region
      %s23 = ssub.s32 128, 128
      %24 = vsyncadd [#allocation6], %s23
      %s26 = sshll.u32 [#allocation5], 4
      %s27 = int_to_ptr.vmem [resolvable:$true] %s26
      %29 = dma.hbm_to_vmem [thread:$0]  %s1, 128, %s27, [#allocation6]
    $region9: #{tpu_custom_call.1} parent=1 // pred_fallthru
      _
    // Predicated region
    $region10: #{tpu_custom_call.1} parent=1 // pred_check
      _
    $region11: #{tpu_custom_call.1} parent=1 // pred_check_branch
      %31 = sbr.rel (0) target = $region13
    $region12: #{tpu_custom_call.1} parent=1 // pred_region
      %32 = dma.done [#allocation3], 32
    $region13: #{tpu_custom_call.1} parent=1 // pred_fallthru
      _
    // Predicated region
    $region14: #{tpu_custom_call.1} parent=1 // pred_check
      _
    $region15: #{tpu_custom_call.1} parent=1 // pred_check_branch
      %34 = sbr.rel (0) target = $region17
    $region16: #{tpu_custom_call.1} parent=1 // pred_region
      %35 = dma.done [#allocation6], 128
    $region17: #{tpu_custom_call.1} parent=1 // pred_fallthru
      _
    %v36 = vld [vmem:[#allocation2] sm:$0x3]
    %v37 = vld [vmem:[#allocation5] sm:$0x1]
    %39 = vset.pattern.permute.xlu0 0
    %40 = vperm.xlu0 %39, %v36
    %v41 = vpop.permute.xlu0 %40
    %v43 = vlaneseq
    %v44 = vshrl.u32 %v43, 7
    %v45 = vsub.s32 0, %v44
    %v46 = vrot.slane %v37, %v45
    %v47 = vmul.f32 %v41, %v46
    %v48 = vld [vmem:[#allocation5 + $0x1] sm:$0x1]
    %49 = vset.pattern.permute.xlu0 1
    %50 = vperm.xlu0 %49, %v36
    %v51 = vpop.permute.xlu0 %50
    %v53 = vlaneseq
    %v54 = vshrl.u32 %v53, 7
    %v55 = vsub.s32 0, %v54
    %v56 = vrot.slane %v48, %v55
    %v57 = vmul.f32 %v51, %v56
    %v58 = vadd.f32 %v47, %v57
    %v59 = vld [vmem:[#allocation5 + $0x2] sm:$0x1]
    %60 = vset.pattern.permute.xlu0 2
    %61 = vperm.xlu0 %60, %v36
    %v62 = vpop.permute.xlu0 %61
    %v64 = vlaneseq
    %v65 = vshrl.u32 %v64, 7
    %v66 = vsub.s32 0, %v65
    %v67 = vrot.slane %v59, %v66
    %v68 = vmul.f32 %v62, %v67
    %v69 = vadd.f32 %v58, %v68
    %v70 = vld [vmem:[#allocation5 + $0x3] sm:$0x1]
    %71 = vset.pattern.permute.xlu0 3
    %72 = vperm.xlu0 %71, %v36
    %v73 = vpop.permute.xlu0 %72
    %v75 = vlaneseq
    %v76 = vshrl.u32 %v75, 7
    %v77 = vsub.s32 0, %v76
    %v78 = vrot.slane %v70, %v77
    %v79 = vmul.f32 %v73, %v78
    %v80 = vadd.f32 %v69, %v79
    %v81 = vmul.f32 %v80, 0.63661975
    %v82 = vadd.f32 %v81, 0.5
    %v83 = vfloor.f32 %v82
    %v84 = vmul.f32 %v83, 1.5703125
    %v85 = vsub.f32 %v80, %v84
    %v86 = vmul.f32 %v83, 0.00048351288
    %v87 = vsub.f32 %v85, %v86
    %v88 = vmul.f32 %v83, 3.138557e-07
    %v89 = vsub.f32 %v87, %v88
    %v90 = vmul.f32 %v83, 6.0771006e-11
    %v91 = vsub.f32 %v89, %v90
    %v92 = vmul.f32 %v91, %v91
    %v93 = vmul.f32 %v91, %v92
    %v94 = vmul.f32 %v92, -0.00019515296
    %v95 = vadd.f32 %v94, 0.008332161
    %v96 = vmul.f32 %v92, %v95
    %v97 = vadd.f32 %v96, -0.16666655
    %v98 = vmul.f32 %v93, %v97
    %v99 = vadd.f32 %v91, %v98
    %v100 = vmul.f32 %v92, 0.5
    %v101 = vsub.f32 1.0, %v100
    %v102 = vmul.f32 %v92, %v92
    %v103 = vmul.f32 %v92, 2.4433157e-05
    %v104 = vadd.f32 %v103, -0.0013887316
    %v105 = vmul.f32 %v92, %v104
    %v106 = vadd.f32 %v105, 0.041666646
    %v107 = vmul.f32 %v102, %v106
    %v108 = vadd.f32 %v101, %v107
    %v109 = vld [vmem:[#allocation5 + $0x4] sm:$0x1]
    %v110 = vcvt.f32.s32.to.zero.pseudo %v109
    %v111 = vcvt.f32.s32.to.zero.pseudo %v83
    %v112 = vlaneseq
    %v113 = vshrl.u32 %v112, 7
    %v114 = vsub.s32 0, %v113
    %v115 = vrot.slane %v110, %v114
    %v116 = vadd.s32 %v111, %v115
    %v117 = vand.u32 %v116, 3
    %v118 = vand.u32 %v117, 1
    %vm119 = vcmp.eq.s32.totalorder %v118, 1
    %v120 = vsel %vm119, %v108, %v99
    %v121 = vand.u32 %v117, 2
    %vm122 = vcmp.eq.s32.totalorder %v121, 2
    %v123 = vsub.f32 0.0, %v120
    %v124 = vsel %vm122, %v123, %v120
    %125 = vst [vmem:[#allocation7] sm:$0x3] %v124
    // Predicated region
    $region18: #{tpu_custom_call.1} parent=1 // pred_check
      _
    $region19: #{tpu_custom_call.1} parent=1 // pred_check_branch
      %127 = sbr.rel (0) target = $region21
    $region20: #{tpu_custom_call.1} parent=1 // pred_region
      %s129 = ssub.s32 32, 32
      %130 = vsyncadd [#allocation4], %s129
      %s132 = sshll.u32 [#allocation7], 4
      %s133 = int_to_ptr.vmem [resolvable:$true] %s132
      %135 = dma.vmem_to_hbm [thread:$0]  %s133, 32, %s2, [#allocation4]
    $region21: #{tpu_custom_call.1} parent=1 // pred_fallthru
      _
    // Predicated region
    $region22: #{tpu_custom_call.1} parent=1 // pred_check
      _
    $region23: #{tpu_custom_call.1} parent=1 // pred_check_branch
      %137 = sbr.rel (0) target = $region25
    $region24: #{tpu_custom_call.1} parent=1 // pred_region
      %138 = dma.done [#allocation4], 32
    $region25: #{tpu_custom_call.1} parent=1 // pred_fallthru
      _
    %139 = vsyncpa [#allocation3], 1
    %140 = vsyncpa [#allocation6], 1
    %141 = vsyncpa [#allocation4], 1

</llo_original>
